<compile_context>
chip_gen: v7x
topology: tpu7x:2x2x1
jax: 0.10.0
libtpu: 0.0.40
codegen_flags: <defaults>
</compile_context>

<pallas_src>
import functools
import math

import jax
import jax.numpy as jnp
from jax.experimental import pallas as pl
from jax.experimental.pallas import tpu as pltpu

_SHIFT = float(math.log(2.0))  # matches torch.log(torch.tensor(2.0)).item()


def _round_up(a, b):
    return ((a + b - 1) // b) * b


def _sublane_multiple(dtype):
    # 8 for 32-bit, 16 for 16-bit, 32 for 8-bit dtypes.
    return {4: 8, 2: 16, 1: 32}.get(jnp.dtype(dtype).itemsize, 8)


def _num_tensorcores():
    """Best-effort TensorCores-per-chip (v5e/v6e -> 1, v7x -> 2). Defaults to 1."""
    try:
        info = pltpu.get_tpu_info()
        for attr in ("num_cores", "num_tensorcores", "tensorcore_count",
                     "core_count", "cores_per_chip", "num_cores_per_chip"):
            v = getattr(info, attr, None)
            if isinstance(v, int) and v > 0:
                return v
    except Exception:
        pass
    try:
        kind = jax.devices()[0].device_kind.lower()
        if "v7" in kind:
            return 2
    except Exception:
        pass
    return 1


def _ssp_f32(x):
    # Numerically stable softplus(x) - log(2):  log1p(exp(-|x|)) + max(x, 0) - log 2
    return jnp.log1p(jnp.exp(-jnp.abs(x))) + jnp.maximum(x, 0.0) - _SHIFT


# --------------------------------------------------------------------------- #
# 1) Standalone elementwise ShiftedSoftplus
# --------------------------------------------------------------------------- #
def _shifted_softplus_kernel(x_ref, o_ref):
    x = x_ref[...].astype(jnp.float32)
    o_ref[...] = _ssp_f32(x).astype(o_ref.dtype)


def shifted_softplus(x, *, lane_width=1024, vmem_budget_bytes=8 << 20,
                     min_grid_steps=None):
    """Apply ShiftedSoftplus elementwise via a Pallas TPU kernel.

    Accepts any shape/dtype. The array is flattened and viewed lane-dense as
    (rows, W) with W a multiple of 128 chosen to divide the element count when
    possible (no pad / slice HBM round trips); the partial tail row block (if
    any) is masked by Pallas.
    """
    orig_shape = x.shape
    dtype = x.dtype
    total = int(x.size)
    if total == 0:
        return x

    itemsize = jnp.dtype(dtype).itemsize
    sub = _sublane_multiple(dtype)

    # Lane-dense slab width: a multiple of 128, preferably dividing `total`
    # exactly so the reshape in/out is a free view (no jnp.pad, no tail slice).
    cand = max(128, (min(int(lane_width), max(total, 128)) // 128) * 128)
    w = 0
    ww = cand
    while ww >= 128:
        if total % ww == 0:
            w = ww
            break
        ww -= 128
    if w == 0:
        # Ragged total: only a sub-W tail pad (< W elements) is added.
        w = min(cand, _round_up(total, 128))
    rows = pl.cdiv(total, w)
    padded_total = rows * w

    # Row tile from a per-step VMEM budget: 2 buffers x (in + out) x tm x w.
    max_tm = max(sub, (vmem_budget_bytes // (4 * w * itemsize) // sub) * sub)
    tm = max_tm
    # On multi-TC chips (v7x) keep >= num_cores row blocks so both cores get
    # work; on single-TC chips (v5e/v6e) the grid is a serial loop, so keep
    # the largest budget-derived tile (tile shrinking is pure overhead there).
    if min_grid_steps is None:
        min_grid_steps = _num_tensorcores()
    if min_grid_steps > 1 and rows > min_grid_steps * sub:
        tm = min(tm, _round_up(pl.cdiv(rows, min_grid_steps), sub))
    tm = min(tm, _round_up(rows, sub))
    if tm >= rows:
        tm = rows  # single full-extent block (always a legal block shape)

    flat = x.reshape(-1)
    if padded_total != total:
        flat = jnp.pad(flat, (0, padded_total - total))
    slab = flat.reshape(rows, w)

    out = pl.pallas_call(
        _shifted_softplus_kernel,
        out_shape=jax.ShapeDtypeStruct((rows, w), dtype),
        grid_spec=pltpu.PrefetchScalarGridSpec(
            num_scalar_prefetch=0,
            grid=(pl.cdiv(rows, tm),),           # partial tail block is masked
            in_specs=[pl.BlockSpec((tm, w), lambda i: (i, 0))],
            out_specs=pl.BlockSpec((tm, w), lambda i: (i, 0)),
        ),
        compiler_params=pltpu.CompilerParams(
            dimension_semantics=("parallel",),
        ),
    )(slab)

    out_flat = out.reshape(-1)
    if padded_total != total:
        out_flat = out_flat[:total]
    return out_flat.reshape(orig_shape)


# --------------------------------------------------------------------------- #
# 2) Fused Linear + ShiftedSoftplus epilogue (dk_proj / dv_proj style)
# --------------------------------------------------------------------------- #
def _linear_ssp_kernel(x_ref, w_ref, b_ref, o_ref, *, compute_dtype):
    tn = o_ref.shape[-1]
    xb = x_ref[...]
    wb = w_ref[...]
    if compute_dtype is not None:
        # bf16 MXU inputs, f32 accumulation (f32xf32 is a slow multi-pass on MXU).
        xb = xb.astype(compute_dtype)
        wb = wb.astype(compute_dtype)
    acc = jnp.dot(xb, wb, preferred_element_type=jnp.float32)
    j = pl.program_id(1)
    off = j * tn
    if tn % 128 == 0:
        off = pl.multiple_of(off, tn)
    acc = acc + b_ref[:, pl.ds(off, tn)].astype(jnp.float32)
    o_ref[...] = _ssp_f32(acc).astype(o_ref.dtype)


def linear_shifted_softplus(x, w, b, *, tile_m=512, tile_n=256,
                            compute_dtype=jnp.bfloat16, out_dtype=None):
    """softplus(x @ w + b) - log(2), activation fused into the matmul epilogue.

    x: [N, K], w: [K, M], b: [M].  K (num_rbf) is small, so it is kept whole
    (no K-tiling / accumulator needed); the grid tiles N and M.  Pass w/x as
    bf16 at the call site to also halve their DMA bytes; set out_dtype=bf16 if
    the consumer accepts it (halves the dominant output HBM traffic).
    """
    n, k = x.shape
    k2, m = w.shape
    assert k == k2 and b.shape == (m,)
    out_dtype = jnp.dtype(out_dtype) if out_dtype is not None else jnp.dtype(x.dtype)

    # Output lane tile: prefer 256-wide (fills the 256x256 MXU on v6e/v7x).
    # tn must divide m so the resident bias slice never reads out of bounds.
    if m % 128 == 0:
        tn = max(128, (min(int(tile_n), m) // 128) * 128)
        while m % tn != 0:
            tn -= 128
    else:
        tn = m
    grid_j = m // tn

    # Row tile: dtype-aware sublane rounding (8 / 16 / 32 for 32 / 16 / 8-bit).
    sub = max(_sublane_multiple(x.dtype), _sublane_multiple(out_dtype))
    tm = max(sub, (min(int(tile_m), _round_up(n, sub)) // sub) * sub)
    if tm >= n:
        tm = n
    # Multi-TC chips (v7x): make sure both TensorCores get at least one block.
    ntc = _num_tensorcores()
    if ntc > 1 and pl.cdiv(n, tm) * grid_j < ntc and n > sub:
        tm = min(tm, max(sub, _round_up(pl.cdiv(n, ntc), sub)))
        if tm >= n:
            tm = n
    grid_i = pl.cdiv(n, tm)   # partial tail row block is masked by Pallas

    b2 = b.reshape(1, m)
    kernel = functools.partial(_linear_ssp_kernel, compute_dtype=compute_dtype)
    out = pl.pallas_call(
        kernel,
        out_shape=jax.ShapeDtypeStruct((n, m), out_dtype),
        grid_spec=pltpu.PrefetchScalarGridSpec(
            num_scalar_prefetch=0,
            grid=(grid_i, grid_j),
            in_specs=[
                pl.BlockSpec((tm, k), lambda i, j: (i, 0)),
                pl.BlockSpec((k, tn), lambda i, j: (0, j)),
                # Bias: one full-width resident block (constant index map),
                # DMA'd once instead of once per grid step.
                pl.BlockSpec((1, m), lambda i, j: (0, 0)),
            ],
            out_specs=pl.BlockSpec((tm, tn), lambda i, j: (i, j)),
        ),
        compiler_params=pltpu.CompilerParams(
            dimension_semantics=("parallel", "parallel"),
        ),
    )(x, w, b2)
    return out


if __name__ == "__main__":
    key = jax.random.PRNGKey(0)
    k1, k2, k3, k4, k5, k6, k7 = jax.random.split(key, 7)

    # 1) Standalone ShiftedSoftplus on an awkward (ragged) shape:
    #    num_edges=37 x num_rbf=50 — neither a multiple of 8 nor of 128.
    x1 = jax.random.normal(k1, (37, 50), dtype=jnp.float32) * 3.0
    y1 = jax.block_until_ready(shifted_softplus(x1))
    ref1 = jax.nn.softplus(x1) - _SHIFT
    assert y1.shape == x1.shape and y1.dtype == x1.dtype
    assert jnp.max(jnp.abs(y1 - ref1)) < 1e-5, "ssp f32 mismatch vs reference"

    # 2) bf16 path; total (48*64=3072) divides the slab width -> no pad/slice.
    x2 = (jax.random.normal(k2, (48, 64), dtype=jnp.float32) * 3.0).astype(jnp.bfloat16)
    y2 = jax.block_until_ready(shifted_softplus(x2))
    ref2 = (jax.nn.softplus(x2.astype(jnp.float32)) - _SHIFT).astype(jnp.bfloat16)
    assert y2.shape == x2.shape and y2.dtype == jnp.bfloat16
    assert jnp.max(jnp.abs(y2.astype(jnp.float32) - ref2.astype(jnp.float32))) < 5e-2, \
        "ssp bf16 mismatch vs reference"

    def ref_linear_ssp(xx, ww, bb, cast):
        if cast is not None:
            xx = xx.astype(cast).astype(jnp.float32)
            ww = ww.astype(cast).astype(jnp.float32)
        return jax.nn.softplus(xx @ ww + bb) - _SHIFT

    # 3) Fused Linear + ShiftedSoftplus (dk_proj-style: num_rbf=50 -> hidden=128),
    #    edge features for 200 edges. bf16 MXU inputs, f32 accumulation/epilogue.
    xe = jax.random.normal(k3, (200, 50), dtype=jnp.float32)
    wd = jax.random.normal(k4, (50, 128), dtype=jnp.float32) * (1.0 / math.sqrt(50.0))
    bd = jax.random.normal(k5, (128,), dtype=jnp.float32) * 0.1
    y3 = jax.block_until_ready(linear_shifted_softplus(xe, wd, bd))
    ref3_bf16 = ref_linear_ssp(xe, wd, bd, jnp.bfloat16)
    ref3_f32 = ref_linear_ssp(xe, wd, bd, None)
    assert y3.shape == ref3_f32.shape and y3.dtype == ref3_f32.dtype
    assert jnp.allclose(y3, ref3_bf16, atol=2e-3, rtol=2e-3), \
        "fused linear+ssp mismatch vs bf16-input reference"
    assert jnp.allclose(y3, ref3_f32, atol=3e-2, rtol=3e-2), \
        "fused linear+ssp mismatch vs f32 reference"

    # 4) dv_proj-style fused Linear + SSP (num_rbf=50 -> hidden*3=384), grid_j > 1.
    wv = jax.random.normal(k6, (50, 384), dtype=jnp.float32) * (1.0 / math.sqrt(50.0))
    bv = jax.random.normal(k7, (384,), dtype=jnp.float32) * 0.1
    y4 = jax.block_until_ready(linear_shifted_softplus(xe, wv, bv))
    ref4_bf16 = ref_linear_ssp(xe, wv, bv, jnp.bfloat16)
    assert y4.shape == ref4_bf16.shape
    assert jnp.allclose(y4, ref4_bf16, atol=2e-3, rtol=2e-3), \
        "fused linear+ssp (dv_proj) mismatch vs bf16-input reference"

    print("KERNEL_OK")
</pallas_src>

<mosaic_0001>
module attributes {stable_mosaic.version = 11 : i64} {
  func.func @_shifted_softplus_kernel(%arg0: i32, %arg1: memref<2x1024xf32, #tpu.memory_space<vmem>>, %arg2: memref<2x1024xf32, #tpu.memory_space<vmem>>) attributes {dimension_semantics = [#tpu.dimension_semantics<parallel>], iteration_bounds = array<i64: 1>, scalar_prefetch = 0 : i64, scratch_operands = 0 : i64, tpu.core_type = #tpu.core_type<tc>, window_params = [{transform_indices = @transform_0, window_bounds = array<i64: 2, 1024>}, {transform_indices = @transform_1, window_bounds = array<i64: 2, 1024>}]} {
    %c0 = arith.constant 0 : index
    %c0_0 = arith.constant 0 : index
    %0 = vector.load %arg1[%c0, %c0_0] : memref<2x1024xf32, #tpu.memory_space<vmem>>, vector<2x1024xf32>
    %1 = math.absf %0 : vector<2x1024xf32>
    %cst = arith.constant 0.000000e+00 : f32
    %2 = vector.broadcast %cst : f32 to vector<2x1024xf32>
    %3 = arith.subf %2, %1 : vector<2x1024xf32>
    %4 = math.exp %3 : vector<2x1024xf32>
    %5 = math.log1p %4 : vector<2x1024xf32>
    %cst_1 = arith.constant 0.000000e+00 : f32
    %6 = vector.broadcast %cst_1 : f32 to vector<2x1024xf32>
    %7 = arith.maximumf %0, %6 : vector<2x1024xf32>
    %8 = arith.addf %5, %7 : vector<2x1024xf32>
    %cst_2 = arith.constant 0.693147182 : f32
    %9 = vector.broadcast %cst_2 : f32 to vector<2x1024xf32>
    %10 = arith.subf %8, %9 : vector<2x1024xf32>
    %c0_3 = arith.constant 0 : index
    %c0_4 = arith.constant 0 : index
    %11 = vector.load %arg2[%c0_3, %c0_4] : memref<2x1024xf32, #tpu.memory_space<vmem>>, vector<2x1024xf32>
    tpu.vector_store %arg2[%c0_3, %c0_4], %10 {strides = array<i32>} : memref<2x1024xf32, #tpu.memory_space<vmem>>, vector<2x1024xf32>,
    return
  }
  func.func @transform_0(%arg0: i32) -> (i32, i32) {
    %c0_i32 = arith.constant 0 : i32
    %c0_i32_0 = arith.constant 0 : i32
    return %arg0, %c0_i32 : i32, i32
  }
  func.func @transform_1(%arg0: i32) -> (i32, i32) {
    %c0_i32 = arith.constant 0 : i32
    %c0_i32_0 = arith.constant 0 : i32
    return %arg0, %c0_i32 : i32, i32
  }
}

</mosaic_0001>

<llo_original>
// kernel: tpu_custom_call.1
$region0: #{tpu_custom_call.1}
  #allocation0 [shape = 'u32[]', space=smem, size = 0x4, offset = 0x4, fixed_abs, tag = 'smem constant byte address 0x4 - core index']
  #allocation1 [shape = 'u32[144,128]{1,0:T(1,128)}', space=vmem, size = 0x12000, scoped, tag = 'internal scratch']
  %s0 = inlined_call_operand.hbm [shape: f32[2,1024], index: 0, kind: input, shape index: {}]
  %s1 = inlined_call_operand.hbm [shape: f32[2,1024], index: 1, kind: output, shape index: {}]
  %s2 = sld [smem:[#allocation0]]
  $region18: #{tpu_custom_call.1} parent=0
    _
  %s4 = ssub.s32 1, %s2
  %s5 = scalar_select 0, %s4, %s2
  $region1: #{tpu_custom_call.1} parent=0
    #allocation2 [shape = 'u8[8192]{0}', space=vmem, size = 0x2000, scoped, tag = 'input window, operand 0, single buffered']
    #allocation3 [shape = 's32[1]{0}', space=sflag, size = 0x4, scoped, tag = 'scoped memory for tpu_custom_call.1']
    #allocation4 [shape = 's32[1]{0}', space=sflag, size = 0x4, scoped, tag = 'scoped memory for tpu_custom_call.1']
    #allocation5 [shape = 'u8[8192]{0}', space=vmem, size = 0x2000, scoped, tag = 'output window, operand 0, single buffered']
    %6 = vsyncpa [#allocation3], 0
    %7 = vsyncpa [#allocation4], 0
    // Predicated region
    $region2: #{tpu_custom_call.1} parent=1 // pred_check
      _
    $region3: #{tpu_custom_call.1} parent=1 // pred_check_branch
      %9 = sbr.rel (0) target = $region5
    $region4: #{tpu_custom_call.1} parent=1 // pred_region
      %s11 = ssub.s32 256, 256
      %12 = vsyncadd [#allocation3], %s11
      %s14 = sshll.u32 [#allocation2], 4
      %s15 = int_to_ptr.vmem [resolvable:$true] %s14
      %17 = dma.hbm_to_vmem [thread:$0]  %s0, 256, %s15, [#allocation3]
    $region5: #{tpu_custom_call.1} parent=1 // pred_fallthru
      _
    // Predicated region
    $region6: #{tpu_custom_call.1} parent=1 // pred_check
      _
    $region7: #{tpu_custom_call.1} parent=1 // pred_check_branch
      %19 = sbr.rel (0) target = $region9
    $region8: #{tpu_custom_call.1} parent=1 // pred_region
      %20 = dma.done [#allocation3], 256
    $region9: #{tpu_custom_call.1} parent=1 // pred_fallthru
      _
    %v21 = vld [vmem:[#allocation2] sm:$0xff]
    %v22 = vld [vmem:[#allocation2 + $0x8] sm:$0xff]
    %v23 = vand.u32 2147483647, %v21
    %v24 = vand.u32 2147483647, %v22
    %v25 = vsub.f32 0.0, %v23
    %v26 = vsub.f32 0.0, %v24
    %v27 = vmul.f32 %v25, 1.442695
    %v28 = vpow.pop %v27
    %v29 = vmul.f32 %v26, 1.442695
    %v30 = vpow.pop %v29
    %v31 = vadd.f32 %v28, 1.0
    %v32 = vlog2.pop %v31
    %v33 = vmul.f32 %v32, 0.6931472
    %v34 = vmul.f32 -0.5, %v28
    %v35 = vadd.f32 %v34, 1.0
    %v36 = vmul.f32 %v35, %v28
    %v37 = vand.u32 2147483647, %v28
    %vm38 = vcmp.lt.f32.partialorder %v37, 0.0004427343
    %v39 = vsel %vm38, %v36, %v33
    %v40 = vadd.f32 %v30, 1.0
    %v41 = vlog2.pop %v40
    %v42 = vmul.f32 %v41, 0.6931472
    %v43 = vmul.f32 -0.5, %v30
    %v44 = vadd.f32 %v43, 1.0
    %v45 = vmul.f32 %v44, %v30
    %v46 = vand.u32 2147483647, %v30
    %vm47 = vcmp.lt.f32.partialorder %v46, 0.0004427343
    %v48 = vsel %vm47, %v45, %v42
    %v49 = vmax.f32 %v21, 0.0
    %v50 = vmax.f32 %v22, 0.0
    %v51 = vadd.f32 %v39, %v49
    %v52 = vadd.f32 %v48, %v50
    %v53 = vsub.f32 %v51, 0.6931472
    %v54 = vsub.f32 %v52, 0.6931472
    %55 = vst [vmem:[#allocation5] sm:$0xff] %v53
    %56 = vst [vmem:[#allocation5 + $0x8] sm:$0xff] %v54
    // Predicated region
    $region10: #{tpu_custom_call.1} parent=1 // pred_check
      _
    $region11: #{tpu_custom_call.1} parent=1 // pred_check_branch
      %58 = sbr.rel (0) target = $region13
    $region12: #{tpu_custom_call.1} parent=1 // pred_region
      %s60 = ssub.s32 256, 256
      %61 = vsyncadd [#allocation4], %s60
      %s63 = sshll.u32 [#allocation5], 4
      %s64 = int_to_ptr.vmem [resolvable:$true] %s63
      %66 = dma.vmem_to_hbm [thread:$0]  %s64, 256, %s1, [#allocation4]
    $region13: #{tpu_custom_call.1} parent=1 // pred_fallthru
      _
    // Predicated region
    $region14: #{tpu_custom_call.1} parent=1 // pred_check
      _
    $region15: #{tpu_custom_call.1} parent=1 // pred_check_branch
      %68 = sbr.rel (0) target = $region17
    $region16: #{tpu_custom_call.1} parent=1 // pred_region
      %69 = dma.done [#allocation4], 256
    $region17: #{tpu_custom_call.1} parent=1 // pred_fallthru
      _
    %70 = vsyncpa [#allocation3], 1
    %71 = vsyncpa [#allocation4], 1

</llo_original>
